<compile_context>
chip_gen: v7x
topology: tpu7x:2x2x1
jax: 0.10.0
libtpu: 0.0.40
codegen_flags: <defaults>
</compile_context>

<pallas_src>
import jax
import jax.numpy as jnp
from jax.experimental import pallas as pl
from jax.experimental.pallas import tpu as pltpu


def _embeddings_kernel(x_ref, w_ref, pos_ref, o_ref):
    # x_ref:   (TB, C_in, P)      native NCHW-derived layout, tokens lane-dense
    # w_ref:   (C_in, C_out)      1x1 conv weight, (in, out)
    # pos_ref: (P+1, C_out) f32   row 0 = cls + pos[0]; rows 1..P = pos[1..P] + bias
    # o_ref:   (TB, P+1, C_out)   full output block, stored at sublane offset 0
    w = w_ref[...]
    pos = pos_ref[...]
    tb, c_in, _ = x_ref.shape

    def body(b, carry):
        xb = x_ref[b]                                             # (C_in, P)
        # Prepend one zero token column in VMEM so the single matmul also
        # produces the cls row (0 @ W = 0).  Cheap: it touches only the small
        # C_in x (P+1) input tile, not the ~8x larger output tile.
        xb_pad = jnp.concatenate(
            [jnp.zeros((c_in, 1), dtype=xb.dtype), xb], axis=1)   # (C_in, P+1)
        acc = jax.lax.dot_general(                                # (P+1, C_out) f32
            xb_pad, w,
            dimension_numbers=(((0,), (0,)), ((), ())),
            preferred_element_type=jnp.float32,
        )
        o_ref[b] = (acc + pos).astype(o_ref.dtype)
        return carry

    jax.lax.fori_loop(0, tb, body, 0, unroll=True)


def _round_up(n, m):
    return ((n + m - 1) // m) * m


def _padded_block_bytes(shape, dtype):
    """Bytes of ONE VMEM buffer for `shape` with (sublane, 128) tile padding."""
    itemsize = jnp.dtype(dtype).itemsize
    sublane = {4: 8, 2: 16, 1: 32}.get(itemsize, 8)
    dims = list(shape)
    if len(dims) >= 1:
        dims[-1] = _round_up(dims[-1], 128)
    if len(dims) >= 2:
        dims[-2] = _round_up(dims[-2], sublane)
    n = 1
    for d in dims:
        n *= d
    return n * itemsize


def _choose_batch_tile(B, per_batch_bytes, const_bytes, *,
                       target_step_bytes=4 << 20, vmem_budget_bytes=24 << 20,
                       max_tb=16):
    """Pick TB from padded, double-buffered block sizes.

    per_batch_bytes: padded single-buffer bytes of (x block + out block) at TB=1.
    const_bytes:     padded single-buffer bytes of the grid-invariant blocks (w, pos).
    """
    per = max(per_batch_bytes, 1)
    tb = max(1, target_step_bytes // (2 * per))                   # ~target per step
    tb_cap = max(1, (vmem_budget_bytes - 2 * const_bytes) // (2 * per))
    tb = min(tb, tb_cap, max_tb, B)
    if B >= 2:
        tb = min(tb, B // 2)   # >= 2 grid steps -> megacore-shardable on v7x
    tb = max(1, int(tb))
    while B % tb:
        tb -= 1
    return tb


def embeddings_forward(x_nchw, conv_w, conv_b, cls_token, pos_emb):
    """x_nchw: (B, C_in, H, W); conv_w: (C_out, C_in, 1, 1); conv_b: (C_out,);
    cls_token: (1, 1, C_out); pos_emb: (1, H*W + 1, C_out).
    Returns (B, H*W + 1, C_out)."""
    B, C_in, H, W = x_nchw.shape
    C_out = conv_w.shape[0]
    P = H * W
    dtype = x_nchw.dtype

    # --- host-side folding (tiny, one-time) ---
    w = jnp.transpose(conv_w.reshape(C_out, C_in), (1, 0)).astype(dtype)   # (C_in, C_out)
    pos = pos_emb.reshape(P + 1, C_out).astype(jnp.float32)
    pos_full = jnp.concatenate(
        [pos[0:1, :] + cls_token.reshape(1, C_out).astype(jnp.float32),    # cls row
         pos[1:, :] + conv_b.reshape(1, C_out).astype(jnp.float32)],       # conv bias
        axis=0,
    )                                                                      # (P+1, C_out) f32

    # Native token layout: pure reshape, no HBM pass, no host-side pad copy.
    x_tok = x_nchw.reshape(B, C_in, P)

    per_batch_bytes = (_padded_block_bytes((1, C_in, P), dtype)
                       + _padded_block_bytes((1, P + 1, C_out), dtype))
    const_bytes = (_padded_block_bytes((C_in, C_out), dtype)
                   + _padded_block_bytes((P + 1, C_out), jnp.float32))
    TB = _choose_batch_tile(B, per_batch_bytes, const_bytes)

    total_vmem = 2 * (TB * per_batch_bytes + const_bytes)   # 2 pipeline buffers
    vmem_limit = int(min(32 << 20, max(16 << 20, 2 * total_vmem)))

    out = pl.pallas_call(
        _embeddings_kernel,
        out_shape=jax.ShapeDtypeStruct((B, P + 1, C_out), dtype),
        grid_spec=pltpu.PrefetchScalarGridSpec(
            num_scalar_prefetch=0,
            grid=(B // TB,),
            in_specs=[
                pl.BlockSpec((TB, C_in, P), lambda i: (i, 0, 0)),
                pl.BlockSpec((C_in, C_out), lambda i: (0, 0)),
                pl.BlockSpec((P + 1, C_out), lambda i: (0, 0)),
            ],
            out_specs=pl.BlockSpec((TB, P + 1, C_out), lambda i: (i, 0, 0)),
        ),
        compiler_params=pltpu.CompilerParams(
            dimension_semantics=("parallel",),
            vmem_limit_bytes=vmem_limit,
        ),
    )(x_tok, w, pos_full)
    return out


def _reference(x_nchw, conv_w, conv_b, cls_token, pos_emb):
    B, C_in, H, W = x_nchw.shape
    C_out = conv_w.shape[0]
    P = H * W
    x_tok = jnp.transpose(x_nchw.reshape(B, C_in, P), (0, 2, 1))
    w = conv_w.reshape(C_out, C_in).T
    patches = x_tok @ w + conv_b[None, None, :]
    cls = jnp.broadcast_to(cls_token, (B, 1, C_out))
    emb = jnp.concatenate([cls, patches], axis=1) + pos_emb
    return emb


if __name__ == "__main__":
    key = jax.random.PRNGKey(0)
    B, C_in, H, W = 2, 4, 16, 16
    C_out = 32
    P = H * W

    k1, k2, k3, k4, k5 = jax.random.split(key, 5)
    x = jax.random.normal(k1, (B, C_in, H, W), dtype=jnp.float32)
    # Conv2d(C_in, C_out, kernel_size=1) parameter shapes: (C_out, C_in, 1, 1), (C_out,)
    conv_w = jax.random.normal(k2, (C_out, C_in, 1, 1), dtype=jnp.float32) * 0.1
    conv_b = jax.random.normal(k3, (C_out,), dtype=jnp.float32) * 0.1
    # nn.Parameter(torch.zeros(...)) in __init__; small random values here so the
    # adds are exercised (synthetic init, deterministic).
    cls_token = jax.random.normal(k4, (1, 1, C_out), dtype=jnp.float32) * 0.02
    pos_emb = jax.random.normal(k5, (1, P + 1, C_out), dtype=jnp.float32) * 0.02

    out = embeddings_forward(x, conv_w, conv_b, cls_token, pos_emb)
    out = jax.block_until_ready(out)

    ref = _reference(x, conv_w, conv_b, cls_token, pos_emb)
    assert out.shape == (B, P + 1, C_out), out.shape
    assert jnp.allclose(out, ref, atol=1e-5, rtol=1e-5), "mismatch vs reference"

    print("KERNEL_OK")
</pallas_src>

<mosaic_0001>
module attributes {stable_mosaic.version = 11 : i64} {
  func.func @_embeddings_kernel(%arg0: i32, %arg1: memref<1x4x256xf32, #tpu.memory_space<vmem>>, %arg2: memref<4x32xf32, #tpu.memory_space<vmem>>, %arg3: memref<257x32xf32, #tpu.memory_space<vmem>>, %arg4: memref<1x257x32xf32, #tpu.memory_space<vmem>>) attributes {dimension_semantics = [#tpu.dimension_semantics<parallel>], iteration_bounds = array<i64: 2>, scalar_prefetch = 0 : i64, scratch_operands = 0 : i64, tpu.core_type = #tpu.core_type<tc>, window_params = [{transform_indices = @transform_0, window_bounds = array<i64: 1, 4, 256>}, {pipeline_mode = #tpu.pipeline_mode<synchronous>, transform_indices = @transform_1, window_bounds = array<i64: 4, 32>}, {pipeline_mode = #tpu.pipeline_mode<synchronous>, transform_indices = @transform_2, window_bounds = array<i64: 257, 32>}, {transform_indices = @transform_3, window_bounds = array<i64: 1, 257, 32>}]} {
    %c0 = arith.constant 0 : index
    %c0_0 = arith.constant 0 : index
    %0 = vector.load %arg2[%c0, %c0_0] : memref<4x32xf32, #tpu.memory_space<vmem>>, vector<4x32xf32>
    %c0_1 = arith.constant 0 : index
    %c0_2 = arith.constant 0 : index
    %1 = vector.load %arg3[%c0_1, %c0_2] : memref<257x32xf32, #tpu.memory_space<vmem>>, vector<257x32xf32>
    %c0_i32 = arith.constant 0 : i32
    %2 = arith.index_cast %c0_i32 : i32 to index
    %c0_3 = arith.constant 0 : index
    %c0_4 = arith.constant 0 : index
    %3 = vector.load %arg1[%2, %c0_3, %c0_4] : memref<1x4x256xf32, #tpu.memory_space<vmem>>, vector<1x4x256xf32>
    %4 = vector.shape_cast %3 : vector<1x4x256xf32> to vector<4x256xf32>
    %cst = arith.constant 0.000000e+00 : f32
    %5 = vector.broadcast %cst : f32 to vector<4x1xf32>
    %6 = tpu.concatenate %5, %4 in 1 : vector<4x1xf32>, vector<4x256xf32> -> vector<4x257xf32>
    %cst_5 = arith.constant dense<0.000000e+00> : vector<257x32xf32>
    %7 = tpu.matmul %6, %0, %cst_5 {dimension_numbers = #tpu.dot_dimension_numbers<[0], [0], [1], [1], [0, 1, 1, 1], [], []>} : vector<4x257xf32>, vector<4x32xf32>, vector<257x32xf32> -> vector<257x32xf32>
    %8 = arith.addf %7, %1 : vector<257x32xf32>
    %9 = arith.index_cast %c0_i32 : i32 to index
    %c0_6 = arith.constant 0 : index
    %c0_7 = arith.constant 0 : index
    %10 = vector.load %arg4[%9, %c0_6, %c0_7] : memref<1x257x32xf32, #tpu.memory_space<vmem>>, vector<1x257x32xf32>
    %11 = vector.shape_cast %10 : vector<1x257x32xf32> to vector<257x32xf32>
    %12 = vector.shape_cast %8 : vector<257x32xf32> to vector<1x257x32xf32>
    tpu.vector_store %arg4[%9, %c0_6, %c0_7], %12 {strides = array<i32>} : memref<1x257x32xf32, #tpu.memory_space<vmem>>, vector<1x257x32xf32>,
    %c1_i32 = arith.constant 1 : i32
    return
  }
  func.func @transform_0(%arg0: i32) -> (i32, i32, i32) {
    %c0_i32 = arith.constant 0 : i32
    %c0_i32_0 = arith.constant 0 : i32
    %c0_i32_1 = arith.constant 0 : i32
    return %arg0, %c0_i32, %c0_i32_0 : i32, i32, i32
  }
  func.func @transform_1(%arg0: i32) -> (i32, i32) {
    %c0_i32 = arith.constant 0 : i32
    %c0_i32_0 = arith.constant 0 : i32
    %c0_i32_1 = arith.constant 0 : i32
    return %c0_i32, %c0_i32_0 : i32, i32
  }
  func.func @transform_2(%arg0: i32) -> (i32, i32) {
    %c0_i32 = arith.constant 0 : i32
    %c0_i32_0 = arith.constant 0 : i32
    %c0_i32_1 = arith.constant 0 : i32
    return %c0_i32, %c0_i32_0 : i32, i32
  }
  func.func @transform_3(%arg0: i32) -> (i32, i32, i32) {
    %c0_i32 = arith.constant 0 : i32
    %c0_i32_0 = arith.constant 0 : i32
    %c0_i32_1 = arith.constant 0 : i32
    return %arg0, %c0_i32, %c0_i32_0 : i32, i32, i32
  }
}

</mosaic_0001>

<llo_original>
// kernel: tpu_custom_call.1
$region0: #{tpu_custom_call.1}
  #allocation0 [shape = 'u32[]', space=smem, size = 0x4, offset = 0x4, fixed_abs, tag = 'smem constant byte address 0x4 - core index']
  #allocation1 [shape = 'u32[144,128]{1,0:T(1,128)}', space=vmem, size = 0x12000, scoped, tag = 'internal scratch']
  %s0 = inlined_call_operand.vmem [shape: f32[2,4,256], index: 0, kind: input, shape index: {}]
  %s1 = inlined_call_operand.vmem [shape: f32[4,32], index: 1, kind: input, shape index: {}]
  %s2 = inlined_call_operand.vmem [shape: f32[257,32], index: 2, kind: input, shape index: {}]
  %s3 = inlined_call_operand.vmem [shape: f32[2,257,32], index: 3, kind: output, shape index: {}]
  %s4 = sld [smem:[#allocation0]]
  $region45: #{tpu_custom_call.1} parent=0
    _
  %s6 = ssub.s32 1, %s4
  %s7 = scalar_select 0, %s6, %s4
  loop: start=0, step=1, limit=4
  $region2: #{tpu_custom_call.1} parent=0 // loop_pre_header
    _
  $region3: #{tpu_custom_call.1} parent=0 // loop_header
    %s9 = sphi 0, %s13
    %p10 = scmp.ge.s32.totalorder %s9, 4
    %s19 = sphi 0, %s21
    %s22 = sphi 0, %s19
    %s23 = sphi 0, %s22
    %s39 = sphi 0, %s23
    %s43 = sphi 0, %s43
    %s45 = sphi 0, %s43
    %s46 = sphi 0, %s45
    %s60 = sphi 0, %s46
    %s64 = sphi 0, %s64
    %s66 = sphi 0, %s64
    %s67 = sphi 0, %s66
    %s81 = sphi 0, %s67
    %s87 = sphi 0, %s89
    %s90 = sphi 0, %s87
    %s91 = sphi 0, %s90
    %s107 = sphi 0, %s91
  $region4: #{tpu_custom_call.1} parent=0 // loop_header_branch
    %12 = sbr.rel (%p10) target = $region8
  $region5: #{tpu_custom_call.1} parent=0 // loop_body
    %s14 = ssub.s32 %s9, 1
    %s15 = ssub.s32 %s9, 2
    %s16 = sadd.s32 %s9, 1
    %s17 = ssub.s32 %s9, %s16
    %p18 = scmp.eq.s32.totalorder %s17, 0
    %s20 = sadd.s32 %s19, 1
    %s21 = scalar_select %p18, %s19, %s20
    %p24 = pneg %p18
    %p25 = scmp.eq.s32.totalorder %s9, 1
    %p26 = por %p24, %p25
    %p27 = scmp.ne.s32.totalorder %s19, %s22
    %p28 = scmp.eq.s32.totalorder %s9, 0
    %p29 = por %p27, %p28
    %p30 = scmp.ne.s32.totalorder %s19, %s22
    %p31 = scmp.eq.s32.totalorder %s14, 1
    %p32 = por %p30, %p31
    %p33 = scmp.ne.s32.totalorder %s22, %s23
    %p34 = scmp.eq.s32.totalorder %s14, 0
    %p35 = por %p33, %p34
    %p36 = scmp.ne.s32.totalorder %s22, %s23
    %p37 = scmp.eq.s32.totalorder %s15, 1
    %p38 = por %p36, %p37
    %p40 = scmp.ne.s32.totalorder %s23, %s39
    %p41 = scmp.eq.s32.totalorder %s15, 0
    %p42 = por %p40, %p41
    %s44 = sadd.s32 %s43, 1
    %p47 = scmp.eq.s32.totalorder %s9, 1
    %p48 = scmp.ne.s32.totalorder %s43, %s45
    %p49 = scmp.eq.s32.totalorder %s9, 0
    %p50 = por %p48, %p49
    %p51 = scmp.ne.s32.totalorder %s43, %s45
    %p52 = scmp.eq.s32.totalorder %s14, 1
    %p53 = por %p51, %p52
    %p54 = scmp.ne.s32.totalorder %s45, %s46
    %p55 = scmp.eq.s32.totalorder %s14, 0
    %p56 = por %p54, %p55
    %p57 = scmp.ne.s32.totalorder %s45, %s46
    %p58 = scmp.eq.s32.totalorder %s15, 1
    %p59 = por %p57, %p58
    %p61 = scmp.ne.s32.totalorder %s46, %s60
    %p62 = scmp.eq.s32.totalorder %s15, 0
    %p63 = por %p61, %p62
    %s65 = sadd.s32 %s64, 1
    %p68 = scmp.eq.s32.totalorder %s9, 1
    %p69 = scmp.ne.s32.totalorder %s64, %s66
    %p70 = scmp.eq.s32.totalorder %s9, 0
    %p71 = por %p69, %p70
    %p72 = scmp.ne.s32.totalorder %s64, %s66
    %p73 = scmp.eq.s32.totalorder %s14, 1
    %p74 = por %p72, %p73
    %p75 = scmp.ne.s32.totalorder %s66, %s67
    %p76 = scmp.eq.s32.totalorder %s14, 0
    %p77 = por %p75, %p76
    %p78 = scmp.ne.s32.totalorder %s66, %s67
    %p79 = scmp.eq.s32.totalorder %s15, 1
    %p80 = por %p78, %p79
    %p82 = scmp.ne.s32.totalorder %s67, %s81
    %p83 = scmp.eq.s32.totalorder %s15, 0
    %p84 = por %p82, %p83
    %s85 = ssub.s32 %s9, %s16
    %p86 = scmp.eq.s32.totalorder %s85, 0
    %s88 = sadd.s32 %s87, 1
    %s89 = scalar_select %p86, %s87, %s88
    %p92 = pneg %p86
    %p93 = scmp.eq.s32.totalorder %s9, 1
    %p94 = por %p92, %p93
    %p95 = scmp.ne.s32.totalorder %s87, %s90
    %p96 = scmp.eq.s32.totalorder %s9, 0
    %p97 = por %p95, %p96
    %p98 = scmp.ne.s32.totalorder %s87, %s90
    %p99 = scmp.eq.s32.totalorder %s14, 1
    %p100 = por %p98, %p99
    %p101 = scmp.ne.s32.totalorder %s90, %s91
    %p102 = scmp.eq.s32.totalorder %s14, 0
    %p103 = por %p101, %p102
    %p104 = scmp.ne.s32.totalorder %s90, %s91
    %p105 = scmp.eq.s32.totalorder %s15, 1
    %p106 = por %p104, %p105
    %p108 = scmp.ne.s32.totalorder %s91, %s107
    %p109 = scmp.eq.s32.totalorder %s15, 0
    %p110 = por %p108, %p109
    %p111 = scmp.le.s32.totalorder 1, %s9
    %p112 = scmp.lt.s32.totalorder %s9, 3
    %p113 = pnand %p111, %p112
    %p114 = pneg %p113
    // Predicated region
    $region9: #{tpu_custom_call.1} parent=5 // pred_check
      _
    $region10: #{tpu_custom_call.1} parent=5 // pred_check_branch
      %116 = sbr.rel (%p113) target = $region12
    $region11: #{tpu_custom_call.1} parent=5 // pred_region
      %s117 = ssub.s32 %s9, 1
      // Predicated region
      $region13: #{tpu_custom_call.1} parent=11 // pred_check
        %p118 = pneg %p56
      $region14: #{tpu_custom_call.1} parent=11 // pred_check_branch
        %120 = sbr.rel (%p118) target = $region16
      $region15: #{tpu_custom_call.1} parent=11 // pred_region
        _
      $region16: #{tpu_custom_call.1} parent=11 // pred_fallthru
        _
      // Predicated region
      $region17: #{tpu_custom_call.1} parent=11 // pred_check
        %p121 = pneg %p77
      $region18: #{tpu_custom_call.1} parent=11 // pred_check_branch
        %123 = sbr.rel (%p121) target = $region20
      $region19: #{tpu_custom_call.1} parent=11 // pred_region
        _
      $region20: #{tpu_custom_call.1} parent=11 // pred_fallthru
        _
    $region12: #{tpu_custom_call.1} parent=5 // pred_fallthru
      _
    %p124 = scmp.lt.s32.totalorder %s9, 2
    // Predicated region
    $region21: #{tpu_custom_call.1} parent=5 // pred_check
      %p125 = pneg %p124
    $region22: #{tpu_custom_call.1} parent=5 // pred_check_branch
      %127 = sbr.rel (%p125) target = $region24
    $region23: #{tpu_custom_call.1} parent=5 // pred_region
      // Predicated region
      $region25: #{tpu_custom_call.1} parent=23 // pred_check
        %p128 = pneg %p29
      $region26: #{tpu_custom_call.1} parent=23 // pred_check_branch
        %130 = sbr.rel (%p128) target = $region28
      $region27: #{tpu_custom_call.1} parent=23 // pred_region
        %p131 = scmp.lt.s32.totalorder %s9, 1
        %s132 = scalar_select %p131, %s9, 1
        %s133 = smul.addr %s132, 2
        %s134 = smul.addr %s133, 4
        %s135 = scalar_lea.vmem %s0, %s134
      $region28: #{tpu_custom_call.1} parent=23 // pred_fallthru
        _
    $region24: #{tpu_custom_call.1} parent=5 // pred_fallthru
      _
    %p136 = scmp.le.s32.totalorder 1, %s9
    %p137 = scmp.lt.s32.totalorder %s9, 3
    %p138 = pnand %p136, %p137
    %p139 = pneg %p138
    // Predicated region
    $region29: #{tpu_custom_call.1} parent=5 // pred_check
      _
    $region30: #{tpu_custom_call.1} parent=5 // pred_check_branch
      %141 = sbr.rel (%p138) target = $region32
    $region31: #{tpu_custom_call.1} parent=5 // pred_region
      %s142 = ssub.s32 %s9, 1
      %p143 = scmp.lt.s32.totalorder %s14, 1
      %s144 = scalar_select %p143, %s14, 1
      %s145 = smul.addr %s144, 2
      %s146 = smul.addr %s145, 4
      %s147 = scalar_lea.vmem %s0, %s146
      %p148 = pneg %p35
      %p149 = pneg %p32
      %p150 = pneg %p56
      %p151 = pneg %p53
      %p152 = pneg %p77
      %p153 = pneg %p74
      %p154 = pneg %p103
      %p155 = pneg %p100
      %p156 = scmp.lt.s32.totalorder %s14, 1
      %s157 = scalar_select %p156, %s14, 1
      %s158 = smul.addr %s157, 33
      %s159 = smul.addr %s158, 8
      %s160 = scalar_lea.vmem %s3, %s159
      %p161 = scmp.lt.s32.totalorder %s14, 1
      %s162 = scalar_select %p161, %s14, 1
      %s163 = smul.addr %s162, 2
      %s164 = smul.addr %s163, 4
      %s165 = scalar_lea.vmem %s0, %s164
      %p166 = scmp.lt.s32.totalorder %s14, 1
      %s167 = scalar_select %p166, %s14, 1
      %s168 = smul.addr %s167, 33
      %s169 = smul.addr %s168, 8
      %s170 = scalar_lea.vmem %s3, %s169
      %v171 = vld [vmem:[%s1] sm:$0xf]
      %v172 = vld [vmem:[%s2] sm:$0xff]
      %v173 = vld [vmem:[%s2 + $0x8] sm:$0xff]
      %v174 = vld [vmem:[%s2 + $0x10] sm:$0xff]
      %v175 = vld [vmem:[%s2 + $0x18] sm:$0xff]
      %v176 = vld [vmem:[%s2 + $0x20] sm:$0xff]
      %v177 = vld [vmem:[%s2 + $0x28] sm:$0xff]
      %v178 = vld [vmem:[%s2 + $0x30] sm:$0xff]
      %v179 = vld [vmem:[%s2 + $0x38] sm:$0xff]
      %v180 = vld [vmem:[%s2 + $0x40] sm:$0xff]
      %v181 = vld [vmem:[%s2 + $0x48] sm:$0xff]
      %v182 = vld [vmem:[%s2 + $0x50] sm:$0xff]
      %v183 = vld [vmem:[%s2 + $0x58] sm:$0xff]
      %v184 = vld [vmem:[%s2 + $0x60] sm:$0xff]
      %v185 = vld [vmem:[%s2 + $0x68] sm:$0xff]
      %v186 = vld [vmem:[%s2 + $0x70] sm:$0xff]
      %v187 = vld [vmem:[%s2 + $0x78] sm:$0xff]
      %v188 = vld [vmem:[%s2 + $0x80] sm:$0xff]
      %v189 = vld [vmem:[%s2 + $0x88] sm:$0xff]
      %v190 = vld [vmem:[%s2 + $0x90] sm:$0xff]
      %v191 = vld [vmem:[%s2 + $0x98] sm:$0xff]
      %v192 = vld [vmem:[%s2 + $0xa0] sm:$0xff]
      %v193 = vld [vmem:[%s2 + $0xa8] sm:$0xff]
      %v194 = vld [vmem:[%s2 + $0xb0] sm:$0xff]
      %v195 = vld [vmem:[%s2 + $0xb8] sm:$0xff]
      %v196 = vld [vmem:[%s2 + $0xc0] sm:$0xff]
      %v197 = vld [vmem:[%s2 + $0xc8] sm:$0xff]
      %v198 = vld [vmem:[%s2 + $0xd0] sm:$0xff]
      %v199 = vld [vmem:[%s2 + $0xd8] sm:$0xff]
      %v200 = vld [vmem:[%s2 + $0xe0] sm:$0xff]
      %v201 = vld [vmem:[%s2 + $0xe8] sm:$0xff]
      %v202 = vld [vmem:[%s2 + $0xf0] sm:$0xff]
      %v203 = vld [vmem:[%s2 + $0xf8] sm:$0xff]
      %v204 = vld [vmem:[%s2 + $0x100] sm:$0x1]
      %v205 = vld [vmem:[%s165] sm:$0xff]
      %v207 = vcombine.high %v205, %v205
      %208 = vrot.lane.b32.xlu0 %v205, 1
      %v209 = vpop.permute.xlu0 %208
      %210 = vrot.lane.b32.xlu0 %v207, 1
      %v211 = vpop.permute.xlu0 %210
      %vm212 = vcmask 7168
      %v213 = vsel %vm212, %v209, %v211
      %v217 = vsel %vm212, 0.0, %v209
      %218 = vxpose.xlu0.b32.start [1/16] %v217, 128
      %219 = vxpose.xlu0.b32.cont [2/16] 0.0, 128
      %220 = vxpose.xlu0.b32.cont [3/16] 0.0, 128
      %221 = vxpose.xlu0.b32.cont [4/16] 0.0, 128
      %222 = vxpose.xlu0.b32.cont [5/16] 0.0, 128
      %223 = vxpose.xlu0.b32.cont [6/16] 0.0, 128
      %224 = vxpose.xlu0.b32.cont [7/16] 0.0, 128
      %225 = vxpose.xlu0.b32.cont [8/16] 0.0, 128
      %226 = vxpose.xlu0.b32.cont [9/16] 0.0, 128
      %227 = vxpose.xlu0.b32.cont [10/16] 0.0, 128
      %228 = vxpose.xlu0.b32.cont [11/16] 0.0, 128
      %229 = vxpose.xlu0.b32.cont [12/16] 0.0, 128
      %230 = vxpose.xlu0.b32.cont [13/16] 0.0, 128
      %231 = vxpose.xlu0.b32.cont [14/16] 0.0, 128
      %232 = vxpose.xlu0.b32.cont [15/16] 0.0, 128
      %233 = vxpose.xlu0.b32.end [16/16] 0.0, 128
      %v234 = vpop.trf.xlu0
      %v235 = vpop.trf.xlu0
      %v236 = vpop.trf.xlu0
      %v237 = vpop.trf.xlu0
      %v238 = vpop.trf.xlu0
      %v239 = vpop.trf.xlu0
      %v240 = vpop.trf.xlu0
      %v241 = vpop.trf.xlu0
      %v242 = vpop.trf.xlu0
      %v243 = vpop.trf.xlu0
      %v244 = vpop.trf.xlu0
      %v245 = vpop.trf.xlu0
      %v246 = vpop.trf.xlu0
      %v247 = vpop.trf.xlu0
      %v248 = vpop.trf.xlu0
      %v249 = vpop.trf.xlu0
      %250 = vxpose.xlu0.b32.start [1/16] %v213, 128
      %251 = vxpose.xlu0.b32.cont [2/16] 0.0, 128
      %252 = vxpose.xlu0.b32.cont [3/16] 0.0, 128
      %253 = vxpose.xlu0.b32.cont [4/16] 0.0, 128
      %254 = vxpose.xlu0.b32.cont [5/16] 0.0, 128
      %255 = vxpose.xlu0.b32.cont [6/16] 0.0, 128
      %256 = vxpose.xlu0.b32.cont [7/16] 0.0, 128
      %257 = vxpose.xlu0.b32.cont [8/16] 0.0, 128
      %258 = vxpose.xlu0.b32.cont [9/16] 0.0, 128
      %259 = vxpose.xlu0.b32.cont [10/16] 0.0, 128
      %260 = vxpose.xlu0.b32.cont [11/16] 0.0, 128
      %261 = vxpose.xlu0.b32.cont [12/16] 0.0, 128
      %262 = vxpose.xlu0.b32.cont [13/16] 0.0, 128
      %263 = vxpose.xlu0.b32.cont [14/16] 0.0, 128
      %264 = vxpose.xlu0.b32.cont [15/16] 0.0, 128
      %265 = vxpose.xlu0.b32.end [16/16] 0.0, 128
      %v266 = vpop.trf.xlu0
      %v267 = vpop.trf.xlu0
      %v268 = vpop.trf.xlu0
      %v269 = vpop.trf.xlu0
      %v270 = vpop.trf.xlu0
      %v271 = vpop.trf.xlu0
      %v272 = vpop.trf.xlu0
      %v273 = vpop.trf.xlu0
      %v274 = vpop.trf.xlu0
      %v275 = vpop.trf.xlu0
      %v276 = vpop.trf.xlu0
      %v277 = vpop.trf.xlu0
      %v278 = vpop.trf.xlu0
      %v279 = vpop.trf.xlu0
      %v280 = vpop.trf.xlu0
      %v281 = vpop.trf.xlu0
      %282 = vxpose.xlu0.b32.start [1/16] %v211, 128
      %283 = vxpose.xlu0.b32.cont [2/16] 0.0, 128
      %284 = vxpose.xlu0.b32.cont [3/16] 0.0, 128
      %285 = vxpose.xlu0.b32.cont [4/16] 0.0, 128
      %286 = vxpose.xlu0.b32.cont [5/16] 0.0, 128
      %287 = vxpose.xlu0.b32.cont [6/16] 0.0, 128
      %288 = vxpose.xlu0.b32.cont [7/16] 0.0, 128
      %289 = vxpose.xlu0.b32.cont [8/16] 0.0, 128
      %290 = vxpose.xlu0.b32.cont [9/16] 0.0, 128
      %291 = vxpose.xlu0.b32.cont [10/16] 0.0, 128
      %292 = vxpose.xlu0.b32.cont [11/16] 0.0, 128
      %293 = vxpose.xlu0.b32.cont [12/16] 0.0, 128
      %294 = vxpose.xlu0.b32.cont [13/16] 0.0, 128
      %295 = vxpose.xlu0.b32.cont [14/16] 0.0, 128
      %296 = vxpose.xlu0.b32.cont [15/16] 0.0, 128
      %297 = vxpose.xlu0.b32.end [16/16] 0.0, 128
      %v298 = vpop.trf.xlu0
      %v299 = vpop.trf.xlu0
      %v300 = vpop.trf.xlu0
      %v301 = vpop.trf.xlu0
      %v302 = vpop.trf.xlu0
      %v303 = vpop.trf.xlu0
      %v304 = vpop.trf.xlu0
      %v305 = vpop.trf.xlu0
      %v306 = vpop.trf.xlu0
      %v307 = vpop.trf.xlu0
      %v308 = vpop.trf.xlu0
      %v309 = vpop.trf.xlu0
      %v310 = vpop.trf.xlu0
      %v311 = vpop.trf.xlu0
      %v312 = vpop.trf.xlu0
      %v313 = vpop.trf.xlu0
      %vm314 = vcmask 31744
      %v316 = vsel %vm314, %v234, 0
      %v319 = vsel %vm314, %v235, 0
      %v322 = vsel %vm314, %v236, 0
      %v325 = vsel %vm314, %v237, 0
      %v328 = vsel %vm314, %v238, 0
      %v331 = vsel %vm314, %v239, 0
      %v334 = vsel %vm314, %v240, 0
      %v337 = vsel %vm314, %v241, 0
      %v340 = vsel %vm314, %v242, 0
      %v343 = vsel %vm314, %v243, 0
      %v346 = vsel %vm314, %v244, 0
      %v349 = vsel %vm314, %v245, 0
      %v352 = vsel %vm314, %v246, 0
      %v355 = vsel %vm314, %v247, 0
      %v358 = vsel %vm314, %v248, 0
      %v361 = vsel %vm314, %v249, 0
      %v364 = vsel %vm314, %v266, 0
      %v367 = vsel %vm314, %v267, 0
      %v370 = vsel %vm314, %v268, 0
      %v373 = vsel %vm314, %v269, 0
      %v376 = vsel %vm314, %v270, 0
      %v379 = vsel %vm314, %v271, 0
      %v382 = vsel %vm314, %v272, 0
      %v385 = vsel %vm314, %v273, 0
      %v388 = vsel %vm314, %v274, 0
      %v391 = vsel %vm314, %v275, 0
      %v394 = vsel %vm314, %v276, 0
      %v397 = vsel %vm314, %v277, 0
      %v400 = vsel %vm314, %v278, 0
      %v403 = vsel %vm314, %v279, 0
      %v406 = vsel %vm314, %v280, 0
      %v409 = vsel %vm314, %v281, 0
      %v412 = vsel %vm314, %v298, 0
      %vm414 = vcmask 1043456
      %v416 = vsel %vm414, %v171, 0
      %418 = vmatprep.subr.mxu0 0.0
      %419 = vmatpush1.msra.mxu0 %v416
      %420 = vmatprep.subr.mxu0 0.0
      %421 = vmatpush1.msra.mxu0 0.0
      %422 = vmatprep.subr.mxu0 0.0
      %423 = vmatpush1.msra.mxu0 0.0
      %424 = vmatprep.subr.mxu0 0.0
      %425 = vmatpush1.msra.mxu0 0.0
      %426 = vmatprep.subr.mxu0 0.0
      %427 = vmatpush1.msra.mxu0 0.0
      %428 = vmatprep.subr.mxu0 0.0
      %429 = vmatpush1.msra.mxu0 0.0
      %430 = vmatprep.subr.mxu0 0.0
      %431 = vmatpush1.msra.mxu0 0.0
      %432 = vmatprep.subr.mxu0 0.0
      %433 = vmatpush1.msra.mxu0 0.0
      %434 = vmatprep.subr.mxu0 0.0
      %435 = vmatpush1.msra.mxu0 0.0
      %436 = vmatprep.subr.mxu0 0.0
      %437 = vmatpush1.msra.mxu0 0.0
      %438 = vmatprep.subr.mxu0 0.0
      %439 = vmatpush1.msra.mxu0 0.0
      %440 = vmatprep.subr.mxu0 0.0
      %441 = vmatpush1.msra.mxu0 0.0
      %442 = vmatprep.subr.mxu0 0.0
      %443 = vmatpush1.msra.mxu0 0.0
      %444 = vmatprep.subr.mxu0 0.0
      %445 = vmatpush1.msra.mxu0 0.0
      %446 = vmatprep.subr.mxu0 0.0
      %447 = vmatpush1.msra.mxu0 0.0
      %448 = vmatprep.subr.mxu0 0.0
      %449 = vmatpush1.msra.mxu0 0.0
      %450 = vmatprep.subr.mxu0 0.0
      %451 = vmatpush1.msra.mxu0 0.0
      %452 = vmatprep.subr.mxu0 0.0
      %453 = vmatpush1.msra.mxu0 0.0
      %454 = vmatprep.subr.mxu0 0.0
      %455 = vmatpush1.msra.mxu0 0.0
      %456 = vmatprep.subr.mxu0 0.0
      %457 = vmatpush1.msra.mxu0 0.0
      %458 = vmatprep.subr.mxu0 0.0
      %459 = vmatpush1.msra.mxu0 0.0
      %460 = vmatprep.subr.mxu0 0.0
      %461 = vmatpush1.msra.mxu0 0.0
      %462 = vmatprep.subr.mxu0 0.0
      %463 = vmatpush1.msra.mxu0 0.0
      %464 = vmatprep.subr.mxu0 0.0
      %465 = vmatpush1.msra.mxu0 0.0
      %466 = vmatprep.subr.mxu0 0.0
      %467 = vmatpush1.msra.mxu0 0.0
      %468 = vmatprep.subr.mxu0 0.0
      %469 = vmatpush1.msra.mxu0 0.0
      %470 = vmatprep.subr.mxu0 0.0
      %471 = vmatpush1.msra.mxu0 0.0
      %472 = vmatprep.subr.mxu0 0.0
      %473 = vmatpush1.msra.mxu0 0.0
      %474 = vmatprep.subr.mxu0 0.0
      %475 = vmatpush1.msra.mxu0 0.0
      %476 = vmatprep.subr.mxu0 0.0
      %477 = vmatpush1.msra.mxu0 0.0
      %478 = vmatprep.subr.mxu0 0.0
      %479 = vmatpush1.msra.mxu0 0.0
      %480 = vmatprep.subr.mxu0 0.0
      %481 = vmatpush1.msra.mxu0 0.0
      %482 = vmatprep.mubr.f32.mxu0 0.0
      %483 = vmatmul.mubr.f32.gmra.mrb[0].mxu0 %v316
      %v484 = vpop.f32.mrb[0].mxu0
      %v485 = vadd.f32 %v172, %v484
      %v486 = vpop.f32.mrb[0].mxu0
      %487 = vmatprep.mubr.f32.mxu0 0.0
      %488 = vmatmul.mubr.f32.gmra.mrb[0].mxu0 %v319
      %v489 = vpop.f32.mrb[0].mxu0
      %v490 = vadd.f32 %v173, %v489
      %v491 = vpop.f32.mrb[0].mxu0
      %492 = vmatprep.mubr.f32.mxu0 0.0
      %493 = vmatmul.mubr.f32.gmra.mrb[0].mxu0 %v322
      %v494 = vpop.f32.mrb[0].mxu0
      %v495 = vadd.f32 %v174, %v494
      %v496 = vpop.f32.mrb[0].mxu0
      %497 = vmatprep.mubr.f32.mxu0 0.0
      %498 = vmatmul.mubr.f32.gmra.mrb[0].mxu0 %v325
      %v499 = vpop.f32.mrb[0].mxu0
      %v500 = vadd.f32 %v175, %v499
      %v501 = vpop.f32.mrb[0].mxu0
      %502 = vmatprep.mubr.f32.mxu0 0.0
      %503 = vmatmul.mubr.f32.gmra.mrb[0].mxu0 %v328
      %v504 = vpop.f32.mrb[0].mxu0
      %v505 = vadd.f32 %v176, %v504
      %v506 = vpop.f32.mrb[0].mxu0
      %507 = vmatprep.mubr.f32.mxu0 0.0
      %508 = vmatmul.mubr.f32.gmra.mrb[0].mxu0 %v331
      %v509 = vpop.f32.mrb[0].mxu0
      %v510 = vadd.f32 %v177, %v509
      %v511 = vpop.f32.mrb[0].mxu0
      %512 = vmatprep.mubr.f32.mxu0 0.0
      %513 = vmatmul.mubr.f32.gmra.mrb[0].mxu0 %v334
      %v514 = vpop.f32.mrb[0].mxu0
      %v515 = vadd.f32 %v178, %v514
      %v516 = vpop.f32.mrb[0].mxu0
      %517 = vmatprep.mubr.f32.mxu0 0.0
      %518 = vmatmul.mubr.f32.gmra.mrb[0].mxu0 %v337
      %v519 = vpop.f32.mrb[0].mxu0
      %v520 = vadd.f32 %v179, %v519
      %v521 = vpop.f32.mrb[0].mxu0
      %522 = vmatprep.mubr.f32.mxu0 0.0
      %523 = vmatmul.mubr.f32.gmra.mrb[0].mxu0 %v340
      %v524 = vpop.f32.mrb[0].mxu0
      %v525 = vadd.f32 %v180, %v524
      %v526 = vpop.f32.mrb[0].mxu0
      %527 = vmatprep.mubr.f32.mxu0 0.0
      %528 = vmatmul.mubr.f32.gmra.mrb[0].mxu0 %v343
      %v529 = vpop.f32.mrb[0].mxu0
      %v530 = vadd.f32 %v181, %v529
      %v531 = vpop.f32.mrb[0].mxu0
      %532 = vmatprep.mubr.f32.mxu0 0.0
      %533 = vmatmul.mubr.f32.gmra.mrb[0].mxu0 %v346
      %v534 = vpop.f32.mrb[0].mxu0
      %v535 = vadd.f32 %v182, %v534
      %v536 = vpop.f32.mrb[0].mxu0
      %537 = vmatprep.mubr.f32.mxu0 0.0
      %538 = vmatmul.mubr.f32.gmra.mrb[0].mxu0 %v349
      %v539 = vpop.f32.mrb[0].mxu0
      %v540 = vadd.f32 %v183, %v539
      %v541 = vpop.f32.mrb[0].mxu0
      %542 = vmatprep.mubr.f32.mxu0 0.0
      %543 = vmatmul.mubr.f32.gmra.mrb[0].mxu0 %v352
      %v544 = vpop.f32.mrb[0].mxu0
      %v545 = vadd.f32 %v184, %v544
      %v546 = vpop.f32.mrb[0].mxu0
      %547 = vmatprep.mubr.f32.mxu0 0.0
      %548 = vmatmul.mubr.f32.gmra.mrb[0].mxu0 %v355
      %v549 = vpop.f32.mrb[0].mxu0
      %v550 = vadd.f32 %v185, %v549
      %v551 = vpop.f32.mrb[0].mxu0
      %552 = vmatprep.mubr.f32.mxu0 0.0
      %553 = vmatmul.mubr.f32.gmra.mrb[0].mxu0 %v358
      %v554 = vpop.f32.mrb[0].mxu0
      %v555 = vadd.f32 %v186, %v554
      %v556 = vpop.f32.mrb[0].mxu0
      %557 = vmatprep.mubr.f32.mxu0 0.0
      %558 = vmatmul.mubr.f32.gmra.mrb[0].mxu0 %v361
      %v559 = vpop.f32.mrb[0].mxu0
      %v560 = vadd.f32 %v187, %v559
      %v561 = vpop.f32.mrb[0].mxu0
      %562 = vmatprep.mubr.f32.mxu0 0.0
      %563 = vmatmul.mubr.f32.gmra.mrb[0].mxu0 %v364
      %v564 = vpop.f32.mrb[0].mxu0
      %v565 = vadd.f32 %v188, %v564
      %v566 = vpop.f32.mrb[0].mxu0
      %567 = vmatprep.mubr.f32.mxu0 0.0
      %568 = vmatmul.mubr.f32.gmra.mrb[0].mxu0 %v367
      %v569 = vpop.f32.mrb[0].mxu0
      %v570 = vadd.f32 %v189, %v569
      %v571 = vpop.f32.mrb[0].mxu0
      %572 = vmatprep.mubr.f32.mxu0 0.0
      %573 = vmatmul.mubr.f32.gmra.mrb[0].mxu0 %v370
      %v574 = vpop.f32.mrb[0].mxu0
      %v575 = vadd.f32 %v190, %v574
      %v576 = vpop.f32.mrb[0].mxu0
      %577 = vmatprep.mubr.f32.mxu0 0.0
      %578 = vmatmul.mubr.f32.gmra.mrb[0].mxu0 %v373
      %v579 = vpop.f32.mrb[0].mxu0
      %v580 = vadd.f32 %v191, %v579
      %v581 = vpop.f32.mrb[0].mxu0
      %582 = vmatprep.mubr.f32.mxu0 0.0
      %583 = vmatmul.mubr.f32.gmra.mrb[0].mxu0 %v376
      %v584 = vpop.f32.mrb[0].mxu0
      %v585 = vadd.f32 %v192, %v584
      %v586 = vpop.f32.mrb[0].mxu0
      %587 = vmatprep.mubr.f32.mxu0 0.0
      %588 = vmatmul.mubr.f32.gmra.mrb[0].mxu0 %v379
      %v589 = vpop.f32.mrb[0].mxu0
      %v590 = vadd.f32 %v193, %v589
      %v591 = vpop.f32.mrb[0].mxu0
      %592 = vmatprep.mubr.f32.mxu0 0.0
      %593 = vmatmul.mubr.f32.gmra.mrb[0].mxu0 %v382
      %v594 = vpop.f32.mrb[0].mxu0
      %v595 = vadd.f32 %v194, %v594
      %v596 = vpop.f32.mrb[0].mxu0
      %597 = vmatprep.mubr.f32.mxu0 0.0
      %598 = vmatmul.mubr.f32.gmra.mrb[0].mxu0 %v385
      %v599 = vpop.f32.mrb[0].mxu0
      %v600 = vadd.f32 %v195, %v599
      %v601 = vpop.f32.mrb[0].mxu0
      %602 = vmatprep.mubr.f32.mxu0 0.0
      %603 = vmatmul.mubr.f32.gmra.mrb[0].mxu0 %v388
      %v604 = vpop.f32.mrb[0].mxu0
      %v605 = vadd.f32 %v196, %v604
      %v606 = vpop.f32.mrb[0].mxu0
      %607 = vmatprep.mubr.f32.mxu0 0.0
      %608 = vmatmul.mubr.f32.gmra.mrb[0].mxu0 %v391
      %v609 = vpop.f32.mrb[0].mxu0
      %v610 = vadd.f32 %v197, %v609
      %v611 = vpop.f32.mrb[0].mxu0
      %612 = vmatprep.mubr.f32.mxu0 0.0
      %613 = vmatmul.mubr.f32.gmra.mrb[0].mxu0 %v394
      %v614 = vpop.f32.mrb[0].mxu0
      %v615 = vadd.f32 %v198, %v614
      %v616 = vpop.f32.mrb[0].mxu0
      %617 = vmatprep.mubr.f32.mxu0 0.0
      %618 = vmatmul.mubr.f32.gmra.mrb[0].mxu0 %v397
      %v619 = vpop.f32.mrb[0].mxu0
      %v620 = vadd.f32 %v199, %v619
      %v621 = vpop.f32.mrb[0].mxu0
      %622 = vmatprep.mubr.f32.mxu0 0.0
      %623 = vmatmul.mubr.f32.gmra.mrb[0].mxu0 %v400
      %v624 = vpop.f32.mrb[0].mxu0
      %v625 = vadd.f32 %v200, %v624
      %v626 = vpop.f32.mrb[0].mxu0
      %627 = vmatprep.mubr.f32.mxu0 0.0
      %628 = vmatmul.mubr.f32.gmra.mrb[0].mxu0 %v403
      %v629 = vpop.f32.mrb[0].mxu0
      %v630 = vadd.f32 %v201, %v629
      %v631 = vpop.f32.mrb[0].mxu0
      %632 = vmatprep.mubr.f32.mxu0 0.0
      %633 = vmatmul.mubr.f32.gmra.mrb[0].mxu0 %v406
      %v634 = vpop.f32.mrb[0].mxu0
      %v635 = vadd.f32 %v202, %v634
      %v636 = vpop.f32.mrb[0].mxu0
      %637 = vmatprep.mubr.f32.mxu0 0.0
      %638 = vmatmul.mubr.f32.gmra.mrb[0].mxu0 %v409
      %v639 = vpop.f32.mrb[0].mxu0
      %v640 = vadd.f32 %v203, %v639
      %v641 = vpop.f32.mrb[0].mxu0
      %642 = vmatprep.mubr.f32.mxu0 0.0
      %643 = vmatmul.mubr.f32.gmra.mrb[0].mxu0 %v412
      %v644 = vpop.f32.mrb[0].mxu0
      %v645 = vadd.f32 %v204, %v644
      %v646 = vpop.f32.mrb[0].mxu0
      %647 = vdwg.mxu0
      %vm648 = vcmask 261120
      %649 = vst.msk [vmem:[%s170] sm:$0xff] %vm648, %v485
      %650 = vst.msk [vmem:[%s170 + $0x8] sm:$0xff] %vm648, %v490
      %651 = vst.msk [vmem:[%s170 + $0x10] sm:$0xff] %vm648, %v495
      %652 = vst.msk [vmem:[%s170 + $0x18] sm:$0xff] %vm648, %v500
      %653 = vst.msk [vmem:[%s170 + $0x20] sm:$0xff] %vm648, %v505
      %654 = vst.msk [vmem:[%s170 + $0x28] sm:$0xff] %vm648, %v510
      %655 = vst.msk [vmem:[%s170 + $0x30] sm:$0xff] %vm648, %v515
      %656 = vst.msk [vmem:[%s170 + $0x38] sm:$0xff] %vm648, %v520
      %657 = vst.msk [vmem:[%s170 + $0x40] sm:$0xff] %vm648, %v525
      %658 = vst.msk [vmem:[%s170 + $0x48] sm:$0xff] %vm648, %v530
      %659 = vst.msk [vmem:[%s170 + $0x50] sm:$0xff] %vm648, %v535
      %660 = vst.msk [vmem:[%s170 + $0x58] sm:$0xff] %vm648, %v540
      %661 = vst.msk [vmem:[%s170 + $0x60] sm:$0xff] %vm648, %v545
      %662 = vst.msk [vmem:[%s170 + $0x68] sm:$0xff] %vm648, %v550
      %663 = vst.msk [vmem:[%s170 + $0x70] sm:$0xff] %vm648, %v555
      %664 = vst.msk [vmem:[%s170 + $0x78] sm:$0xff] %vm648, %v560
      %665 = vst.msk [vmem:[%s170 + $0x80] sm:$0xff] %vm648, %v565
      %666 = vst.msk [vmem:[%s170 + $0x88] sm:$0xff] %vm648, %v570
      %667 = vst.msk [vmem:[%s170 + $0x90] sm:$0xff] %vm648, %v575
      %668 = vst.msk [vmem:[%s170 + $0x98] sm:$0xff] %vm648, %v580
      %669 = vst.msk [vmem:[%s170 + $0xa0] sm:$0xff] %vm648, %v585
      %670 = vst.msk [vmem:[%s170 + $0xa8] sm:$0xff] %vm648, %v590
      %671 = vst.msk [vmem:[%s170 + $0xb0] sm:$0xff] %vm648, %v595
      %672 = vst.msk [vmem:[%s170 + $0xb8] sm:$0xff] %vm648, %v600
      %673 = vst.msk [vmem:[%s170 + $0xc0] sm:$0xff] %vm648, %v605
      %674 = vst.msk [vmem:[%s170 + $0xc8] sm:$0xff] %vm648, %v610
      %675 = vst.msk [vmem:[%s170 + $0xd0] sm:$0xff] %vm648, %v615
      %676 = vst.msk [vmem:[%s170 + $0xd8] sm:$0xff] %vm648, %v620
      %677 = vst.msk [vmem:[%s170 + $0xe0] sm:$0xff] %vm648, %v625
      %678 = vst.msk [vmem:[%s170 + $0xe8] sm:$0xff] %vm648, %v630
      %679 = vst.msk [vmem:[%s170 + $0xf0] sm:$0xff] %vm648, %v635
      %680 = vst.msk [vmem:[%s170 + $0xf8] sm:$0xff] %vm648, %v640
      %vm681 = vcmask 253952
      %682 = vst.msk [vmem:[%s170 + $0x100] sm:$0x1] %vm681, %v645
      %p683 = scmp.lt.s32.totalorder %s14, 1
      %s684 = scalar_select %p683, %s14, 1
      %s685 = smul.addr %s684, 33
      %s686 = smul.addr %s685, 8
      %s687 = scalar_lea.vmem %s3, %s686
      // Predicated region
      $region33: #{tpu_custom_call.1} parent=31 // pred_check
        %p688 = pneg %p100
      $region34: #{tpu_custom_call.1} parent=31 // pred_check_branch
        %690 = sbr.rel (%p688) target = $region36
      $region35: #{tpu_custom_call.1} parent=31 // pred_region
        _
      $region36: #{tpu_custom_call.1} parent=31 // pred_fallthru
        _
    $region32: #{tpu_custom_call.1} parent=5 // pred_fallthru
      _
    %p691 = scmp.le.s32.totalorder 2, %s9
    // Predicated region
    $region37: #{tpu_custom_call.1} parent=5 // pred_check
      %p692 = pneg %p691
    $region38: #{tpu_custom_call.1} parent=5 // pred_check_branch
      %694 = sbr.rel (%p692) target = $region40
    $region39: #{tpu_custom_call.1} parent=5 // pred_region
      %s695 = ssub.s32 %s9, 2
      // Predicated region
      $region41: #{tpu_custom_call.1} parent=39 // pred_check
        %p696 = pneg %p106
      $region42: #{tpu_custom_call.1} parent=39 // pred_check_branch
        %698 = sbr.rel (%p696) target = $region44
      $region43: #{tpu_custom_call.1} parent=39 // pred_region
        %p699 = scmp.lt.s32.totalorder %s15, 1
        %s700 = scalar_select %p699, %s15, 1
        %s701 = smul.addr %s700, 33
        %s702 = smul.addr %s701, 8
        %s703 = scalar_lea.vmem %s3, %s702
      $region44: #{tpu_custom_call.1} parent=39 // pred_fallthru
        _
    $region40: #{tpu_custom_call.1} parent=5 // pred_fallthru
      _
  $region6: #{tpu_custom_call.1} parent=0 // loop_footer
    %s13 = sadd.s32 1, %s9
  $region7: #{tpu_custom_call.1} parent=0 // loop_footer_branch
    %8 = sbr.rel target = $region3
  $region8: #{tpu_custom_call.1} parent=0 // loop_exit
    _

</llo_original>
